<compile_context>
chip_gen: v7x
topology: tpu7x:2x2x1
jax: 0.10.0
libtpu: 0.0.40
codegen_flags: <defaults>
</compile_context>

<pallas_src>
import functools

import jax
import jax.numpy as jnp
from jax.experimental import pallas as pl
from jax.experimental.pallas import tpu as pltpu


def _round_up(x: int, m: int) -> int:
    return (x + m - 1) // m * m


# ----------------------------------------------------------------------------
# Pallas kernel
#   feat_ref : (NCB*P, C, CH) f32   lane l of chunk-row (nc*P + p) = window nc*CH+l, pixel p
#   lab_ref  : (NCB*P, 1, CH) i32   class id of that pixel
#   inv_ref  : (NCB*P, 1, CH) f32   1 / count(class id over the whole image)  (divide_no_nan)
#   out_ref  : (1, 1, CH)     f32   per-grid-step, per-lane partial SSE
#   sse_ref  : (C, CH)        f32   VMEM scratch accumulator (lane resident)
# ----------------------------------------------------------------------------
def _car_intra_c2p_kernel(feat_ref, lab_ref, inv_ref, out_ref, sse_ref, *, P, NCB):
    sse_ref[...] = jnp.zeros_like(sse_ref)

    @pl.loop(0, NCB)
    def _chunk(ci):
        base = ci * P
        sse = jnp.zeros(sse_ref.shape, dtype=jnp.float32)
        # P = ws*ws is tiny (4 for the default ws=2) -> static unroll of the
        # P x P same-class masked accumulation; everything is VPU work over
        # (C, CH) lane-dense tiles.
        for p in range(P):
            lab_p = lab_ref[base + p]            # (1, CH) int32
            inv_p = inv_ref[base + p]            # (1, CH) f32
            acc = jnp.zeros(sse_ref.shape, dtype=jnp.float32)
            for q in range(P):
                same = (lab_p == lab_ref[base + q]).astype(jnp.float32)  # (1, CH)
                acc = acc + same * feat_ref[base + q]                    # (C, CH)
            err = feat_ref[base + p] - inv_p * acc
            sse = sse + err * err
        sse_ref[...] += sse

    # Reduce only over channels (sublanes) here; the cross-lane / cross-step
    # reduction is deferred to the wrapper (cheap, better f32 accumulation).
    out_ref[0] = jnp.sum(sse_ref[...], axis=0, keepdims=True)            # (1, CH)


# ----------------------------------------------------------------------------
# Wrapper
# ----------------------------------------------------------------------------
def car_loss_intra_c2p(y_pred, y_true, *, num_classes=6, window_size=2,
                       apply_filter=False, filter_w=None, filter_b=None):
    ws = window_size
    if apply_filter:
        # 1x1 conv == channel matmul (plain-JAX glue; off by default like the module)
        y_pred = (jnp.einsum('oc,bchw->bohw', filter_w, y_pred)
                  + filter_b[None, :, None, None])

    B, C, H, W = y_pred.shape
    K = num_classes
    h, w = H // ws, W // ws
    G = B * h * w              # number of ws x ws windows
    P = ws * ws                # pixels per window

    y_pred = y_pred.astype(jnp.float32)
    labels = y_true.astype(jnp.int32)

    # per-(batch, class) pixel counts over the whole image + divide_no_nan inverse
    counts = jnp.sum(
        (labels[:, :, :, None] == jnp.arange(K, dtype=jnp.int32)).astype(jnp.float32),
        axis=(1, 2))                                                    # (B, K)
    inv_counts = jnp.where(counts > 0, 1.0 / jnp.maximum(counts, 1.0), 0.0)
    inv_pix = jnp.take_along_axis(inv_counts, labels.reshape(B, -1),
                                  axis=1).reshape(B, H, W)              # (B, H, W)

    # einops 'b c (h hsp w wsp) -> (b h w) (hsp wsp) c' window rearrange (XLA glue)
    # TODO(synk): fold this rearrange into a direct NCHW BlockSpec read (lane/sublane
    # roll pairing for ws=2) to skip the one extra HBM pass of the transposed copy.
    def to_groups_c(x):   # (B, D, H, W) -> (G, P, D)
        D = x.shape[1]
        xx = x.reshape(B, D, h, ws, w, ws)
        xx = jnp.transpose(xx, (0, 2, 4, 3, 5, 1))
        return xx.reshape(G, P, D)

    def to_groups_s(x):   # (B, H, W) -> (G, P)
        xx = x.reshape(B, h, ws, w, ws)
        xx = jnp.transpose(xx, (0, 1, 3, 2, 4))
        return xx.reshape(G, P)

    feat = to_groups_c(y_pred)          # (G, P, C) f32
    lab = to_groups_s(labels)           # (G, P)    i32
    inv = to_groups_s(inv_pix)          # (G, P)    f32

    # ---- chunked, lane-major layout (no class/channel padding) ----
    CH = min(512, _round_up(max(G, 1), 128))     # windows per lane-chunk (mult of 128)
    NCg = pl.cdiv(G, CH)                         # number of chunks
    bytes_per_chunk = P * (C + 2) * CH * 4
    NCB = max(1, min(8, (4 * 1024 * 1024) // max(bytes_per_chunk, 1), NCg))
    NCg_pad = _round_up(NCg, NCB)
    num_steps = NCg_pad // NCB
    G_pad = NCg_pad * CH

    # Zero-padded windows have feat == 0 => recon == 0 => err == 0 (no SSE bias).
    pad = G_pad - G
    feat = jnp.pad(feat, ((0, pad), (0, 0), (0, 0)))
    lab = jnp.pad(lab, ((0, pad), (0, 0)))
    inv = jnp.pad(inv, ((0, pad), (0, 0)))

    # (G_pad, P, C) -> (NCg_pad*P, C, CH): groups on the 128-lane axis, C on sublanes.
    feat_k = feat.reshape(NCg_pad, CH, P, C).transpose(0, 2, 3, 1).reshape(NCg_pad * P, C, CH)
    lab_k = lab.reshape(NCg_pad, CH, P).transpose(0, 2, 1).reshape(NCg_pad * P, 1, CH)
    inv_k = inv.reshape(NCg_pad, CH, P).transpose(0, 2, 1).reshape(NCg_pad * P, 1, CH)

    # TODO(synk): channel-chunk the (C, CH) tiles for the apply_filter path
    # (C = num_filter = 512); the default C = num_classes path fits in a few vregs.
    kernel = functools.partial(_car_intra_c2p_kernel, P=P, NCB=NCB)

    partials = pl.pallas_call(
        kernel,
        out_shape=jax.ShapeDtypeStruct((num_steps, 1, CH), jnp.float32),
        grid_spec=pltpu.PrefetchScalarGridSpec(
            num_scalar_prefetch=0,
            grid=(num_steps,),
            in_specs=[
                pl.BlockSpec((NCB * P, C, CH), lambda i: (i, 0, 0)),
                pl.BlockSpec((NCB * P, 1, CH), lambda i: (i, 0, 0)),
                pl.BlockSpec((NCB * P, 1, CH), lambda i: (i, 0, 0)),
            ],
            out_specs=pl.BlockSpec((1, 1, CH), lambda i: (i, 0, 0)),
            scratch_shapes=[pltpu.VMEM((C, CH), jnp.float32)],
        ),
        compiler_params=pltpu.CompilerParams(
            dimension_semantics=("parallel",),
            vmem_limit_bytes=32 * 1024 * 1024),
    )(feat_k, lab_k, inv_k)

    # Final reduction in the wrapper (padded lanes/steps contribute exactly 0);
    # nn.MSELoss(reduction='mean') divides by the unpadded element count.
    return jnp.sum(partials) / float(G * P * C)


# ----------------------------------------------------------------------------
# Pure-JAX reference (mirrors the torch forward) for the correctness check
# ----------------------------------------------------------------------------
def car_loss_intra_c2p_ref(y_pred, y_true, *, num_classes=6, window_size=2):
    B, C, H, W = y_pred.shape
    ws = window_size
    h, w = H // ws, W // ws
    K = num_classes

    y_pred = y_pred.astype(jnp.float32)
    onehot = jax.nn.one_hot(y_true.astype(jnp.int32), K, dtype=jnp.float32)   # [B,H,W,K]
    y_true_oh = jnp.transpose(onehot, (0, 3, 1, 2))                           # [B,K,H,W]
    nz = jnp.sum(y_true_oh != 0, axis=(2, 3), keepdims=True).astype(jnp.float32)
    y_true_scale = jnp.where(nz > 0, y_true_oh / jnp.maximum(nz, 1.0), 0.0)

    def to_groups(x):  # [B, D, H, W] -> [(B h w), ws*ws, D]
        Bx, D = x.shape[0], x.shape[1]
        xx = x.reshape(Bx, D, h, ws, w, ws)
        xx = jnp.transpose(xx, (0, 2, 4, 3, 5, 1))
        return xx.reshape(Bx * h * w, ws * ws, D)

    feat = to_groups(y_pred)
    label = to_groups(y_true_oh)
    lscale = to_groups(y_true_scale)
    cc = jnp.einsum('gpk,gpc->gkc', lscale, feat)
    recon = jnp.einsum('gpk,gkc->gpc', label, cc)
    return jnp.mean((feat - recon) ** 2)


if __name__ == "__main__":
    key = jax.random.PRNGKey(0)
    k1, k2 = jax.random.split(key)

    B, num_classes, H, W = 2, 6, 16, 16
    ws = 2
    y_pred = jax.random.normal(k1, (B, num_classes, H, W), dtype=jnp.float32)
    y_true = jax.random.randint(k2, (B, H, W), 0, num_classes)

    # Deterministic 1x1-conv "filter" parameters (the module owns them; apply_filter
    # defaults to False so they are unused in this run).
    num_filter = 512
    filter_w = ((jnp.arange(num_filter * num_classes, dtype=jnp.float32)
                 .reshape(num_filter, num_classes) % 7) - 3.0) * 0.05
    filter_b = jnp.zeros((num_filter,), dtype=jnp.float32)

    loss = car_loss_intra_c2p(y_pred, y_true,
                              num_classes=num_classes, window_size=ws,
                              apply_filter=False,
                              filter_w=filter_w, filter_b=filter_b)
    loss = jax.block_until_ready(loss)

    ref = car_loss_intra_c2p_ref(y_pred, y_true,
                                 num_classes=num_classes, window_size=ws)
    assert jnp.allclose(loss, ref, rtol=1e-4, atol=1e-6), (loss, ref)

    print("KERNEL_OK")
</pallas_src>

<mosaic_0001>
module attributes {stable_mosaic.version = 11 : i64} {
  func.func @_car_intra_c2p_kernel(%arg0: i32, %arg1: memref<4x6x128xf32, #tpu.memory_space<vmem>>, %arg2: memref<4x1x128xi32, #tpu.memory_space<vmem>>, %arg3: memref<4x1x128xf32, #tpu.memory_space<vmem>>, %arg4: memref<1x1x128xf32, #tpu.memory_space<vmem>>, %arg5: memref<6x128xf32, #tpu.memory_space<vmem>>) attributes {dimension_semantics = [#tpu.dimension_semantics<parallel>], iteration_bounds = array<i64: 1>, scalar_prefetch = 0 : i64, scratch_operands = 1 : i64, tpu.core_type = #tpu.core_type<tc>, window_params = [{transform_indices = @transform_0, window_bounds = array<i64: 4, 6, 128>}, {transform_indices = @transform_1, window_bounds = array<i64: 4, 1, 128>}, {transform_indices = @transform_2, window_bounds = array<i64: 4, 1, 128>}, {transform_indices = @transform_3, window_bounds = array<i64: 1, 1, 128>}]} {
    %cst = arith.constant 0.000000e+00 : f32
    %0 = vector.broadcast %cst : f32 to vector<6x128xf32>
    %c0 = arith.constant 0 : index
    %c0_0 = arith.constant 0 : index
    %1 = vector.load %arg5[%c0, %c0_0] : memref<6x128xf32, #tpu.memory_space<vmem>>, vector<6x128xf32>
    tpu.vector_store %arg5[%c0, %c0_0], %0 {strides = array<i32>} : memref<6x128xf32, #tpu.memory_space<vmem>>, vector<6x128xf32>,
    %c0_i32 = arith.constant 0 : i32
    %c1_i32 = arith.constant 1 : i32
    %2 = arith.muli %c0_i32, %c1_i32 : i32
    %c0_i32_1 = arith.constant 0 : i32
    %3 = arith.addi %c0_i32_1, %2 : i32
    %c4_i32 = arith.constant 4 : i32
    %4 = arith.muli %3, %c4_i32 : i32
    %cst_2 = arith.constant 0.000000e+00 : f32
    %5 = vector.broadcast %cst_2 : f32 to vector<6x128xf32>
    %c0_i32_3 = arith.constant 0 : i32
    %6 = arith.addi %4, %c0_i32_3 : i32
    %7 = arith.index_cast %6 : i32 to index
    %c0_4 = arith.constant 0 : index
    %c0_5 = arith.constant 0 : index
    %8 = vector.load %arg2[%7, %c0_4, %c0_5] : memref<4x1x128xi32, #tpu.memory_space<vmem>>, vector<1x1x128xi32>
    %9 = vector.shape_cast %8 : vector<1x1x128xi32> to vector<1x128xi32>
    %c0_i32_6 = arith.constant 0 : i32
    %10 = arith.addi %4, %c0_i32_6 : i32
    %11 = arith.index_cast %10 : i32 to index
    %c0_7 = arith.constant 0 : index
    %c0_8 = arith.constant 0 : index
    %12 = vector.load %arg3[%11, %c0_7, %c0_8] : memref<4x1x128xf32, #tpu.memory_space<vmem>>, vector<1x1x128xf32>
    %13 = vector.shape_cast %12 : vector<1x1x128xf32> to vector<1x128xf32>
    %cst_9 = arith.constant 0.000000e+00 : f32
    %14 = vector.broadcast %cst_9 : f32 to vector<6x128xf32>
    %c0_i32_10 = arith.constant 0 : i32
    %15 = arith.addi %4, %c0_i32_10 : i32
    %16 = arith.index_cast %15 : i32 to index
    %c0_11 = arith.constant 0 : index
    %c0_12 = arith.constant 0 : index
    %17 = vector.load %arg2[%16, %c0_11, %c0_12] : memref<4x1x128xi32, #tpu.memory_space<vmem>>, vector<1x1x128xi32>
    %18 = vector.shape_cast %17 : vector<1x1x128xi32> to vector<1x128xi32>
    %19 = arith.cmpi eq, %9, %18 : vector<1x128xi32>
    %20 = arith.extui %19 : vector<1x128xi1> to vector<1x128xi32>
    %21 = arith.sitofp %20 : vector<1x128xi32> to vector<1x128xf32>
    %c0_i32_13 = arith.constant 0 : i32
    %22 = arith.addi %4, %c0_i32_13 : i32
    %23 = arith.index_cast %22 : i32 to index
    %c0_14 = arith.constant 0 : index
    %c0_15 = arith.constant 0 : index
    %24 = vector.load %arg1[%23, %c0_14, %c0_15] : memref<4x6x128xf32, #tpu.memory_space<vmem>>, vector<1x6x128xf32>
    %25 = vector.shape_cast %24 : vector<1x6x128xf32> to vector<6x128xf32>
    %26 = vector.broadcast %21 : vector<1x128xf32> to vector<6x128xf32>
    %27 = arith.mulf %26, %25 : vector<6x128xf32>
    %28 = arith.addf %14, %27 : vector<6x128xf32>
    %c1_i32_16 = arith.constant 1 : i32
    %29 = arith.addi %4, %c1_i32_16 : i32
    %30 = arith.index_cast %29 : i32 to index
    %c0_17 = arith.constant 0 : index
    %c0_18 = arith.constant 0 : index
    %31 = vector.load %arg2[%30, %c0_17, %c0_18] : memref<4x1x128xi32, #tpu.memory_space<vmem>>, vector<1x1x128xi32>
    %32 = vector.shape_cast %31 : vector<1x1x128xi32> to vector<1x128xi32>
    %33 = arith.cmpi eq, %9, %32 : vector<1x128xi32>
    %34 = arith.extui %33 : vector<1x128xi1> to vector<1x128xi32>
    %35 = arith.sitofp %34 : vector<1x128xi32> to vector<1x128xf32>
    %c1_i32_19 = arith.constant 1 : i32
    %36 = arith.addi %4, %c1_i32_19 : i32
    %37 = arith.index_cast %36 : i32 to index
    %c0_20 = arith.constant 0 : index
    %c0_21 = arith.constant 0 : index
    %38 = vector.load %arg1[%37, %c0_20, %c0_21] : memref<4x6x128xf32, #tpu.memory_space<vmem>>, vector<1x6x128xf32>
    %39 = vector.shape_cast %38 : vector<1x6x128xf32> to vector<6x128xf32>
    %40 = vector.broadcast %35 : vector<1x128xf32> to vector<6x128xf32>
    %41 = arith.mulf %40, %39 : vector<6x128xf32>
    %42 = arith.addf %28, %41 : vector<6x128xf32>
    %c2_i32 = arith.constant 2 : i32
    %43 = arith.addi %4, %c2_i32 : i32
    %44 = arith.index_cast %43 : i32 to index
    %c0_22 = arith.constant 0 : index
    %c0_23 = arith.constant 0 : index
    %45 = vector.load %arg2[%44, %c0_22, %c0_23] : memref<4x1x128xi32, #tpu.memory_space<vmem>>, vector<1x1x128xi32>
    %46 = vector.shape_cast %45 : vector<1x1x128xi32> to vector<1x128xi32>
    %47 = arith.cmpi eq, %9, %46 : vector<1x128xi32>
    %48 = arith.extui %47 : vector<1x128xi1> to vector<1x128xi32>
    %49 = arith.sitofp %48 : vector<1x128xi32> to vector<1x128xf32>
    %c2_i32_24 = arith.constant 2 : i32
    %50 = arith.addi %4, %c2_i32_24 : i32
    %51 = arith.index_cast %50 : i32 to index
    %c0_25 = arith.constant 0 : index
    %c0_26 = arith.constant 0 : index
    %52 = vector.load %arg1[%51, %c0_25, %c0_26] : memref<4x6x128xf32, #tpu.memory_space<vmem>>, vector<1x6x128xf32>
    %53 = vector.shape_cast %52 : vector<1x6x128xf32> to vector<6x128xf32>
    %54 = vector.broadcast %49 : vector<1x128xf32> to vector<6x128xf32>
    %55 = arith.mulf %54, %53 : vector<6x128xf32>
    %56 = arith.addf %42, %55 : vector<6x128xf32>
    %c3_i32 = arith.constant 3 : i32
    %57 = arith.addi %4, %c3_i32 : i32
    %58 = arith.index_cast %57 : i32 to index
    %c0_27 = arith.constant 0 : index
    %c0_28 = arith.constant 0 : index
    %59 = vector.load %arg2[%58, %c0_27, %c0_28] : memref<4x1x128xi32, #tpu.memory_space<vmem>>, vector<1x1x128xi32>
    %60 = vector.shape_cast %59 : vector<1x1x128xi32> to vector<1x128xi32>
    %61 = arith.cmpi eq, %9, %60 : vector<1x128xi32>
    %62 = arith.extui %61 : vector<1x128xi1> to vector<1x128xi32>
    %63 = arith.sitofp %62 : vector<1x128xi32> to vector<1x128xf32>
    %c3_i32_29 = arith.constant 3 : i32
    %64 = arith.addi %4, %c3_i32_29 : i32
    %65 = arith.index_cast %64 : i32 to index
    %c0_30 = arith.constant 0 : index
    %c0_31 = arith.constant 0 : index
    %66 = vector.load %arg1[%65, %c0_30, %c0_31] : memref<4x6x128xf32, #tpu.memory_space<vmem>>, vector<1x6x128xf32>
    %67 = vector.shape_cast %66 : vector<1x6x128xf32> to vector<6x128xf32>
    %68 = vector.broadcast %63 : vector<1x128xf32> to vector<6x128xf32>
    %69 = arith.mulf %68, %67 : vector<6x128xf32>
    %70 = arith.addf %56, %69 : vector<6x128xf32>
    %c0_i32_32 = arith.constant 0 : i32
    %71 = arith.addi %4, %c0_i32_32 : i32
    %72 = arith.index_cast %71 : i32 to index
    %c0_33 = arith.constant 0 : index
    %c0_34 = arith.constant 0 : index
    %73 = vector.load %arg1[%72, %c0_33, %c0_34] : memref<4x6x128xf32, #tpu.memory_space<vmem>>, vector<1x6x128xf32>
    %74 = vector.shape_cast %73 : vector<1x6x128xf32> to vector<6x128xf32>
    %75 = vector.broadcast %13 : vector<1x128xf32> to vector<6x128xf32>
    %76 = arith.mulf %75, %70 : vector<6x128xf32>
    %77 = arith.subf %74, %76 : vector<6x128xf32>
    %78 = arith.mulf %77, %77 : vector<6x128xf32>
    %79 = arith.addf %5, %78 : vector<6x128xf32>
    %c1_i32_35 = arith.constant 1 : i32
    %80 = arith.addi %4, %c1_i32_35 : i32
    %81 = arith.index_cast %80 : i32 to index
    %c0_36 = arith.constant 0 : index
    %c0_37 = arith.constant 0 : index
    %82 = vector.load %arg2[%81, %c0_36, %c0_37] : memref<4x1x128xi32, #tpu.memory_space<vmem>>, vector<1x1x128xi32>
    %83 = vector.shape_cast %82 : vector<1x1x128xi32> to vector<1x128xi32>
    %c1_i32_38 = arith.constant 1 : i32
    %84 = arith.addi %4, %c1_i32_38 : i32
    %85 = arith.index_cast %84 : i32 to index
    %c0_39 = arith.constant 0 : index
    %c0_40 = arith.constant 0 : index
    %86 = vector.load %arg3[%85, %c0_39, %c0_40] : memref<4x1x128xf32, #tpu.memory_space<vmem>>, vector<1x1x128xf32>
    %87 = vector.shape_cast %86 : vector<1x1x128xf32> to vector<1x128xf32>
    %cst_41 = arith.constant 0.000000e+00 : f32
    %88 = vector.broadcast %cst_41 : f32 to vector<6x128xf32>
    %c0_i32_42 = arith.constant 0 : i32
    %89 = arith.addi %4, %c0_i32_42 : i32
    %90 = arith.index_cast %89 : i32 to index
    %c0_43 = arith.constant 0 : index
    %c0_44 = arith.constant 0 : index
    %91 = vector.load %arg2[%90, %c0_43, %c0_44] : memref<4x1x128xi32, #tpu.memory_space<vmem>>, vector<1x1x128xi32>
    %92 = vector.shape_cast %91 : vector<1x1x128xi32> to vector<1x128xi32>
    %93 = arith.cmpi eq, %83, %92 : vector<1x128xi32>
    %94 = arith.extui %93 : vector<1x128xi1> to vector<1x128xi32>
    %95 = arith.sitofp %94 : vector<1x128xi32> to vector<1x128xf32>
    %c0_i32_45 = arith.constant 0 : i32
    %96 = arith.addi %4, %c0_i32_45 : i32
    %97 = arith.index_cast %96 : i32 to index
    %c0_46 = arith.constant 0 : index
    %c0_47 = arith.constant 0 : index
    %98 = vector.load %arg1[%97, %c0_46, %c0_47] : memref<4x6x128xf32, #tpu.memory_space<vmem>>, vector<1x6x128xf32>
    %99 = vector.shape_cast %98 : vector<1x6x128xf32> to vector<6x128xf32>
    %100 = vector.broadcast %95 : vector<1x128xf32> to vector<6x128xf32>
    %101 = arith.mulf %100, %99 : vector<6x128xf32>
    %102 = arith.addf %88, %101 : vector<6x128xf32>
    %c1_i32_48 = arith.constant 1 : i32
    %103 = arith.addi %4, %c1_i32_48 : i32
    %104 = arith.index_cast %103 : i32 to index
    %c0_49 = arith.constant 0 : index
    %c0_50 = arith.constant 0 : index
    %105 = vector.load %arg2[%104, %c0_49, %c0_50] : memref<4x1x128xi32, #tpu.memory_space<vmem>>, vector<1x1x128xi32>
    %106 = vector.shape_cast %105 : vector<1x1x128xi32> to vector<1x128xi32>
    %107 = arith.cmpi eq, %83, %106 : vector<1x128xi32>
    %108 = arith.extui %107 : vector<1x128xi1> to vector<1x128xi32>
    %109 = arith.sitofp %108 : vector<1x128xi32> to vector<1x128xf32>
    %c1_i32_51 = arith.constant 1 : i32
    %110 = arith.addi %4, %c1_i32_51 : i32
    %111 = arith.index_cast %110 : i32 to index
    %c0_52 = arith.constant 0 : index
    %c0_53 = arith.constant 0 : index
    %112 = vector.load %arg1[%111, %c0_52, %c0_53] : memref<4x6x128xf32, #tpu.memory_space<vmem>>, vector<1x6x128xf32>
    %113 = vector.shape_cast %112 : vector<1x6x128xf32> to vector<6x128xf32>
    %114 = vector.broadcast %109 : vector<1x128xf32> to vector<6x128xf32>
    %115 = arith.mulf %114, %113 : vector<6x128xf32>
    %116 = arith.addf %102, %115 : vector<6x128xf32>
    %c2_i32_54 = arith.constant 2 : i32
    %117 = arith.addi %4, %c2_i32_54 : i32
    %118 = arith.index_cast %117 : i32 to index
    %c0_55 = arith.constant 0 : index
    %c0_56 = arith.constant 0 : index
    %119 = vector.load %arg2[%118, %c0_55, %c0_56] : memref<4x1x128xi32, #tpu.memory_space<vmem>>, vector<1x1x128xi32>
    %120 = vector.shape_cast %119 : vector<1x1x128xi32> to vector<1x128xi32>
    %121 = arith.cmpi eq, %83, %120 : vector<1x128xi32>
    %122 = arith.extui %121 : vector<1x128xi1> to vector<1x128xi32>
    %123 = arith.sitofp %122 : vector<1x128xi32> to vector<1x128xf32>
    %c2_i32_57 = arith.constant 2 : i32
    %124 = arith.addi %4, %c2_i32_57 : i32
    %125 = arith.index_cast %124 : i32 to index
    %c0_58 = arith.constant 0 : index
    %c0_59 = arith.constant 0 : index
    %126 = vector.load %arg1[%125, %c0_58, %c0_59] : memref<4x6x128xf32, #tpu.memory_space<vmem>>, vector<1x6x128xf32>
    %127 = vector.shape_cast %126 : vector<1x6x128xf32> to vector<6x128xf32>
    %128 = vector.broadcast %123 : vector<1x128xf32> to vector<6x128xf32>
    %129 = arith.mulf %128, %127 : vector<6x128xf32>
    %130 = arith.addf %116, %129 : vector<6x128xf32>
    %c3_i32_60 = arith.constant 3 : i32
    %131 = arith.addi %4, %c3_i32_60 : i32
    %132 = arith.index_cast %131 : i32 to index
    %c0_61 = arith.constant 0 : index
    %c0_62 = arith.constant 0 : index
    %133 = vector.load %arg2[%132, %c0_61, %c0_62] : memref<4x1x128xi32, #tpu.memory_space<vmem>>, vector<1x1x128xi32>
    %134 = vector.shape_cast %133 : vector<1x1x128xi32> to vector<1x128xi32>
    %135 = arith.cmpi eq, %83, %134 : vector<1x128xi32>
    %136 = arith.extui %135 : vector<1x128xi1> to vector<1x128xi32>
    %137 = arith.sitofp %136 : vector<1x128xi32> to vector<1x128xf32>
    %c3_i32_63 = arith.constant 3 : i32
    %138 = arith.addi %4, %c3_i32_63 : i32
    %139 = arith.index_cast %138 : i32 to index
    %c0_64 = arith.constant 0 : index
    %c0_65 = arith.constant 0 : index
    %140 = vector.load %arg1[%139, %c0_64, %c0_65] : memref<4x6x128xf32, #tpu.memory_space<vmem>>, vector<1x6x128xf32>
    %141 = vector.shape_cast %140 : vector<1x6x128xf32> to vector<6x128xf32>
    %142 = vector.broadcast %137 : vector<1x128xf32> to vector<6x128xf32>
    %143 = arith.mulf %142, %141 : vector<6x128xf32>
    %144 = arith.addf %130, %143 : vector<6x128xf32>
    %c1_i32_66 = arith.constant 1 : i32
    %145 = arith.addi %4, %c1_i32_66 : i32
    %146 = arith.index_cast %145 : i32 to index
    %c0_67 = arith.constant 0 : index
    %c0_68 = arith.constant 0 : index
    %147 = vector.load %arg1[%146, %c0_67, %c0_68] : memref<4x6x128xf32, #tpu.memory_space<vmem>>, vector<1x6x128xf32>
    %148 = vector.shape_cast %147 : vector<1x6x128xf32> to vector<6x128xf32>
    %149 = vector.broadcast %87 : vector<1x128xf32> to vector<6x128xf32>
    %150 = arith.mulf %149, %144 : vector<6x128xf32>
    %151 = arith.subf %148, %150 : vector<6x128xf32>
    %152 = arith.mulf %151, %151 : vector<6x128xf32>
    %153 = arith.addf %79, %152 : vector<6x128xf32>
    %c2_i32_69 = arith.constant 2 : i32
    %154 = arith.addi %4, %c2_i32_69 : i32
    %155 = arith.index_cast %154 : i32 to index
    %c0_70 = arith.constant 0 : index
    %c0_71 = arith.constant 0 : index
    %156 = vector.load %arg2[%155, %c0_70, %c0_71] : memref<4x1x128xi32, #tpu.memory_space<vmem>>, vector<1x1x128xi32>
    %157 = vector.shape_cast %156 : vector<1x1x128xi32> to vector<1x128xi32>
    %c2_i32_72 = arith.constant 2 : i32
    %158 = arith.addi %4, %c2_i32_72 : i32
    %159 = arith.index_cast %158 : i32 to index
    %c0_73 = arith.constant 0 : index
    %c0_74 = arith.constant 0 : index
    %160 = vector.load %arg3[%159, %c0_73, %c0_74] : memref<4x1x128xf32, #tpu.memory_space<vmem>>, vector<1x1x128xf32>
    %161 = vector.shape_cast %160 : vector<1x1x128xf32> to vector<1x128xf32>
    %cst_75 = arith.constant 0.000000e+00 : f32
    %162 = vector.broadcast %cst_75 : f32 to vector<6x128xf32>
    %c0_i32_76 = arith.constant 0 : i32
    %163 = arith.addi %4, %c0_i32_76 : i32
    %164 = arith.index_cast %163 : i32 to index
    %c0_77 = arith.constant 0 : index
    %c0_78 = arith.constant 0 : index
    %165 = vector.load %arg2[%164, %c0_77, %c0_78] : memref<4x1x128xi32, #tpu.memory_space<vmem>>, vector<1x1x128xi32>
    %166 = vector.shape_cast %165 : vector<1x1x128xi32> to vector<1x128xi32>
    %167 = arith.cmpi eq, %157, %166 : vector<1x128xi32>
    %168 = arith.extui %167 : vector<1x128xi1> to vector<1x128xi32>
    %169 = arith.sitofp %168 : vector<1x128xi32> to vector<1x128xf32>
    %c0_i32_79 = arith.constant 0 : i32
    %170 = arith.addi %4, %c0_i32_79 : i32
    %171 = arith.index_cast %170 : i32 to index
    %c0_80 = arith.constant 0 : index
    %c0_81 = arith.constant 0 : index
    %172 = vector.load %arg1[%171, %c0_80, %c0_81] : memref<4x6x128xf32, #tpu.memory_space<vmem>>, vector<1x6x128xf32>
    %173 = vector.shape_cast %172 : vector<1x6x128xf32> to vector<6x128xf32>
    %174 = vector.broadcast %169 : vector<1x128xf32> to vector<6x128xf32>
    %175 = arith.mulf %174, %173 : vector<6x128xf32>
    %176 = arith.addf %162, %175 : vector<6x128xf32>
    %c1_i32_82 = arith.constant 1 : i32
    %177 = arith.addi %4, %c1_i32_82 : i32
    %178 = arith.index_cast %177 : i32 to index
    %c0_83 = arith.constant 0 : index
    %c0_84 = arith.constant 0 : index
    %179 = vector.load %arg2[%178, %c0_83, %c0_84] : memref<4x1x128xi32, #tpu.memory_space<vmem>>, vector<1x1x128xi32>
    %180 = vector.shape_cast %179 : vector<1x1x128xi32> to vector<1x128xi32>
    %181 = arith.cmpi eq, %157, %180 : vector<1x128xi32>
    %182 = arith.extui %181 : vector<1x128xi1> to vector<1x128xi32>
    %183 = arith.sitofp %182 : vector<1x128xi32> to vector<1x128xf32>
    %c1_i32_85 = arith.constant 1 : i32
    %184 = arith.addi %4, %c1_i32_85 : i32
    %185 = arith.index_cast %184 : i32 to index
    %c0_86 = arith.constant 0 : index
    %c0_87 = arith.constant 0 : index
    %186 = vector.load %arg1[%185, %c0_86, %c0_87] : memref<4x6x128xf32, #tpu.memory_space<vmem>>, vector<1x6x128xf32>
    %187 = vector.shape_cast %186 : vector<1x6x128xf32> to vector<6x128xf32>
    %188 = vector.broadcast %183 : vector<1x128xf32> to vector<6x128xf32>
    %189 = arith.mulf %188, %187 : vector<6x128xf32>
    %190 = arith.addf %176, %189 : vector<6x128xf32>
    %c2_i32_88 = arith.constant 2 : i32
    %191 = arith.addi %4, %c2_i32_88 : i32
    %192 = arith.index_cast %191 : i32 to index
    %c0_89 = arith.constant 0 : index
    %c0_90 = arith.constant 0 : index
    %193 = vector.load %arg2[%192, %c0_89, %c0_90] : memref<4x1x128xi32, #tpu.memory_space<vmem>>, vector<1x1x128xi32>
    %194 = vector.shape_cast %193 : vector<1x1x128xi32> to vector<1x128xi32>
    %195 = arith.cmpi eq, %157, %194 : vector<1x128xi32>
    %196 = arith.extui %195 : vector<1x128xi1> to vector<1x128xi32>
    %197 = arith.sitofp %196 : vector<1x128xi32> to vector<1x128xf32>
    %c2_i32_91 = arith.constant 2 : i32
    %198 = arith.addi %4, %c2_i32_91 : i32
    %199 = arith.index_cast %198 : i32 to index
    %c0_92 = arith.constant 0 : index
    %c0_93 = arith.constant 0 : index
    %200 = vector.load %arg1[%199, %c0_92, %c0_93] : memref<4x6x128xf32, #tpu.memory_space<vmem>>, vector<1x6x128xf32>
    %201 = vector.shape_cast %200 : vector<1x6x128xf32> to vector<6x128xf32>
    %202 = vector.broadcast %197 : vector<1x128xf32> to vector<6x128xf32>
    %203 = arith.mulf %202, %201 : vector<6x128xf32>
    %204 = arith.addf %190, %203 : vector<6x128xf32>
    %c3_i32_94 = arith.constant 3 : i32
    %205 = arith.addi %4, %c3_i32_94 : i32
    %206 = arith.index_cast %205 : i32 to index
    %c0_95 = arith.constant 0 : index
    %c0_96 = arith.constant 0 : index
    %207 = vector.load %arg2[%206, %c0_95, %c0_96] : memref<4x1x128xi32, #tpu.memory_space<vmem>>, vector<1x1x128xi32>
    %208 = vector.shape_cast %207 : vector<1x1x128xi32> to vector<1x128xi32>
    %209 = arith.cmpi eq, %157, %208 : vector<1x128xi32>
    %210 = arith.extui %209 : vector<1x128xi1> to vector<1x128xi32>
    %211 = arith.sitofp %210 : vector<1x128xi32> to vector<1x128xf32>
    %c3_i32_97 = arith.constant 3 : i32
    %212 = arith.addi %4, %c3_i32_97 : i32
    %213 = arith.index_cast %212 : i32 to index
    %c0_98 = arith.constant 0 : index
    %c0_99 = arith.constant 0 : index
    %214 = vector.load %arg1[%213, %c0_98, %c0_99] : memref<4x6x128xf32, #tpu.memory_space<vmem>>, vector<1x6x128xf32>
    %215 = vector.shape_cast %214 : vector<1x6x128xf32> to vector<6x128xf32>
    %216 = vector.broadcast %211 : vector<1x128xf32> to vector<6x128xf32>
    %217 = arith.mulf %216, %215 : vector<6x128xf32>
    %218 = arith.addf %204, %217 : vector<6x128xf32>
    %c2_i32_100 = arith.constant 2 : i32
    %219 = arith.addi %4, %c2_i32_100 : i32
    %220 = arith.index_cast %219 : i32 to index
    %c0_101 = arith.constant 0 : index
    %c0_102 = arith.constant 0 : index
    %221 = vector.load %arg1[%220, %c0_101, %c0_102] : memref<4x6x128xf32, #tpu.memory_space<vmem>>, vector<1x6x128xf32>
    %222 = vector.shape_cast %221 : vector<1x6x128xf32> to vector<6x128xf32>
    %223 = vector.broadcast %161 : vector<1x128xf32> to vector<6x128xf32>
    %224 = arith.mulf %223, %218 : vector<6x128xf32>
    %225 = arith.subf %222, %224 : vector<6x128xf32>
    %226 = arith.mulf %225, %225 : vector<6x128xf32>
    %227 = arith.addf %153, %226 : vector<6x128xf32>
    %c3_i32_103 = arith.constant 3 : i32
    %228 = arith.addi %4, %c3_i32_103 : i32
    %229 = arith.index_cast %228 : i32 to index
    %c0_104 = arith.constant 0 : index
    %c0_105 = arith.constant 0 : index
    %230 = vector.load %arg2[%229, %c0_104, %c0_105] : memref<4x1x128xi32, #tpu.memory_space<vmem>>, vector<1x1x128xi32>
    %231 = vector.shape_cast %230 : vector<1x1x128xi32> to vector<1x128xi32>
    %c3_i32_106 = arith.constant 3 : i32
    %232 = arith.addi %4, %c3_i32_106 : i32
    %233 = arith.index_cast %232 : i32 to index
    %c0_107 = arith.constant 0 : index
    %c0_108 = arith.constant 0 : index
    %234 = vector.load %arg3[%233, %c0_107, %c0_108] : memref<4x1x128xf32, #tpu.memory_space<vmem>>, vector<1x1x128xf32>
    %235 = vector.shape_cast %234 : vector<1x1x128xf32> to vector<1x128xf32>
    %cst_109 = arith.constant 0.000000e+00 : f32
    %236 = vector.broadcast %cst_109 : f32 to vector<6x128xf32>
    %c0_i32_110 = arith.constant 0 : i32
    %237 = arith.addi %4, %c0_i32_110 : i32
    %238 = arith.index_cast %237 : i32 to index
    %c0_111 = arith.constant 0 : index
    %c0_112 = arith.constant 0 : index
    %239 = vector.load %arg2[%238, %c0_111, %c0_112] : memref<4x1x128xi32, #tpu.memory_space<vmem>>, vector<1x1x128xi32>
    %240 = vector.shape_cast %239 : vector<1x1x128xi32> to vector<1x128xi32>
    %241 = arith.cmpi eq, %231, %240 : vector<1x128xi32>
    %242 = arith.extui %241 : vector<1x128xi1> to vector<1x128xi32>
    %243 = arith.sitofp %242 : vector<1x128xi32> to vector<1x128xf32>
    %c0_i32_113 = arith.constant 0 : i32
    %244 = arith.addi %4, %c0_i32_113 : i32
    %245 = arith.index_cast %244 : i32 to index
    %c0_114 = arith.constant 0 : index
    %c0_115 = arith.constant 0 : index
    %246 = vector.load %arg1[%245, %c0_114, %c0_115] : memref<4x6x128xf32, #tpu.memory_space<vmem>>, vector<1x6x128xf32>
    %247 = vector.shape_cast %246 : vector<1x6x128xf32> to vector<6x128xf32>
    %248 = vector.broadcast %243 : vector<1x128xf32> to vector<6x128xf32>
    %249 = arith.mulf %248, %247 : vector<6x128xf32>
    %250 = arith.addf %236, %249 : vector<6x128xf32>
    %c1_i32_116 = arith.constant 1 : i32
    %251 = arith.addi %4, %c1_i32_116 : i32
    %252 = arith.index_cast %251 : i32 to index
    %c0_117 = arith.constant 0 : index
    %c0_118 = arith.constant 0 : index
    %253 = vector.load %arg2[%252, %c0_117, %c0_118] : memref<4x1x128xi32, #tpu.memory_space<vmem>>, vector<1x1x128xi32>
    %254 = vector.shape_cast %253 : vector<1x1x128xi32> to vector<1x128xi32>
    %255 = arith.cmpi eq, %231, %254 : vector<1x128xi32>
    %256 = arith.extui %255 : vector<1x128xi1> to vector<1x128xi32>
    %257 = arith.sitofp %256 : vector<1x128xi32> to vector<1x128xf32>
    %c1_i32_119 = arith.constant 1 : i32
    %258 = arith.addi %4, %c1_i32_119 : i32
    %259 = arith.index_cast %258 : i32 to index
    %c0_120 = arith.constant 0 : index
    %c0_121 = arith.constant 0 : index
    %260 = vector.load %arg1[%259, %c0_120, %c0_121] : memref<4x6x128xf32, #tpu.memory_space<vmem>>, vector<1x6x128xf32>
    %261 = vector.shape_cast %260 : vector<1x6x128xf32> to vector<6x128xf32>
    %262 = vector.broadcast %257 : vector<1x128xf32> to vector<6x128xf32>
    %263 = arith.mulf %262, %261 : vector<6x128xf32>
    %264 = arith.addf %250, %263 : vector<6x128xf32>
    %c2_i32_122 = arith.constant 2 : i32
    %265 = arith.addi %4, %c2_i32_122 : i32
    %266 = arith.index_cast %265 : i32 to index
    %c0_123 = arith.constant 0 : index
    %c0_124 = arith.constant 0 : index
    %267 = vector.load %arg2[%266, %c0_123, %c0_124] : memref<4x1x128xi32, #tpu.memory_space<vmem>>, vector<1x1x128xi32>
    %268 = vector.shape_cast %267 : vector<1x1x128xi32> to vector<1x128xi32>
    %269 = arith.cmpi eq, %231, %268 : vector<1x128xi32>
    %270 = arith.extui %269 : vector<1x128xi1> to vector<1x128xi32>
    %271 = arith.sitofp %270 : vector<1x128xi32> to vector<1x128xf32>
    %c2_i32_125 = arith.constant 2 : i32
    %272 = arith.addi %4, %c2_i32_125 : i32
    %273 = arith.index_cast %272 : i32 to index
    %c0_126 = arith.constant 0 : index
    %c0_127 = arith.constant 0 : index
    %274 = vector.load %arg1[%273, %c0_126, %c0_127] : memref<4x6x128xf32, #tpu.memory_space<vmem>>, vector<1x6x128xf32>
    %275 = vector.shape_cast %274 : vector<1x6x128xf32> to vector<6x128xf32>
    %276 = vector.broadcast %271 : vector<1x128xf32> to vector<6x128xf32>
    %277 = arith.mulf %276, %275 : vector<6x128xf32>
    %278 = arith.addf %264, %277 : vector<6x128xf32>
    %c3_i32_128 = arith.constant 3 : i32
    %279 = arith.addi %4, %c3_i32_128 : i32
    %280 = arith.index_cast %279 : i32 to index
    %c0_129 = arith.constant 0 : index
    %c0_130 = arith.constant 0 : index
    %281 = vector.load %arg2[%280, %c0_129, %c0_130] : memref<4x1x128xi32, #tpu.memory_space<vmem>>, vector<1x1x128xi32>
    %282 = vector.shape_cast %281 : vector<1x1x128xi32> to vector<1x128xi32>
    %283 = arith.cmpi eq, %231, %282 : vector<1x128xi32>
    %284 = arith.extui %283 : vector<1x128xi1> to vector<1x128xi32>
    %285 = arith.sitofp %284 : vector<1x128xi32> to vector<1x128xf32>
    %c3_i32_131 = arith.constant 3 : i32
    %286 = arith.addi %4, %c3_i32_131 : i32
    %287 = arith.index_cast %286 : i32 to index
    %c0_132 = arith.constant 0 : index
    %c0_133 = arith.constant 0 : index
    %288 = vector.load %arg1[%287, %c0_132, %c0_133] : memref<4x6x128xf32, #tpu.memory_space<vmem>>, vector<1x6x128xf32>
    %289 = vector.shape_cast %288 : vector<1x6x128xf32> to vector<6x128xf32>
    %290 = vector.broadcast %285 : vector<1x128xf32> to vector<6x128xf32>
    %291 = arith.mulf %290, %289 : vector<6x128xf32>
    %292 = arith.addf %278, %291 : vector<6x128xf32>
    %c3_i32_134 = arith.constant 3 : i32
    %293 = arith.addi %4, %c3_i32_134 : i32
    %294 = arith.index_cast %293 : i32 to index
    %c0_135 = arith.constant 0 : index
    %c0_136 = arith.constant 0 : index
    %295 = vector.load %arg1[%294, %c0_135, %c0_136] : memref<4x6x128xf32, #tpu.memory_space<vmem>>, vector<1x6x128xf32>
    %296 = vector.shape_cast %295 : vector<1x6x128xf32> to vector<6x128xf32>
    %297 = vector.broadcast %235 : vector<1x128xf32> to vector<6x128xf32>
    %298 = arith.mulf %297, %292 : vector<6x128xf32>
    %299 = arith.subf %296, %298 : vector<6x128xf32>
    %300 = arith.mulf %299, %299 : vector<6x128xf32>
    %301 = arith.addf %227, %300 : vector<6x128xf32>
    %c0_137 = arith.constant 0 : index
    %c0_138 = arith.constant 0 : index
    %302 = vector.load %arg5[%c0_137, %c0_138] : memref<6x128xf32, #tpu.memory_space<vmem>>, vector<6x128xf32>
    %303 = arith.addf %302, %301 : vector<6x128xf32>
    %c0_139 = arith.constant 0 : index
    %c0_140 = arith.constant 0 : index
    %304 = vector.load %arg5[%c0_139, %c0_140] : memref<6x128xf32, #tpu.memory_space<vmem>>, vector<6x128xf32>
    tpu.vector_store %arg5[%c0_139, %c0_140], %303 {strides = array<i32>} : memref<6x128xf32, #tpu.memory_space<vmem>>, vector<6x128xf32>,
    %c1_i32_141 = arith.constant 1 : i32
    %c0_142 = arith.constant 0 : index
    %c0_143 = arith.constant 0 : index
    %305 = vector.load %arg5[%c0_142, %c0_143] : memref<6x128xf32, #tpu.memory_space<vmem>>, vector<6x128xf32>
    %cst_144 = arith.constant dense<0.000000e+00> : vector<128xf32>
    %306 = vector.multi_reduction <add>, %305, %cst_144 [0] : vector<6x128xf32> to vector<128xf32>
    %307 = vector.shape_cast %306 : vector<128xf32> to vector<1x128xf32>
    %c0_145 = arith.constant 0 : index
    %c0_146 = arith.constant 0 : index
    %c0_147 = arith.constant 0 : index
    %308 = vector.load %arg4[%c0_145, %c0_146, %c0_147] : memref<1x1x128xf32, #tpu.memory_space<vmem>>, vector<1x1x128xf32>
    %309 = vector.shape_cast %308 : vector<1x1x128xf32> to vector<1x128xf32>
    %310 = vector.shape_cast %307 : vector<1x128xf32> to vector<1x1x128xf32>
    tpu.vector_store %arg4[%c0_145, %c0_146, %c0_147], %310 {strides = array<i32>} : memref<1x1x128xf32, #tpu.memory_space<vmem>>, vector<1x1x128xf32>,
    return
  }
  func.func @transform_0(%arg0: i32) -> (i32, i32, i32) {
    %c0_i32 = arith.constant 0 : i32
    %c0_i32_0 = arith.constant 0 : i32
    %c0_i32_1 = arith.constant 0 : i32
    return %arg0, %c0_i32, %c0_i32_0 : i32, i32, i32
  }
  func.func @transform_1(%arg0: i32) -> (i32, i32, i32) {
    %c0_i32 = arith.constant 0 : i32
    %c0_i32_0 = arith.constant 0 : i32
    %c0_i32_1 = arith.constant 0 : i32
    return %arg0, %c0_i32, %c0_i32_0 : i32, i32, i32
  }
  func.func @transform_2(%arg0: i32) -> (i32, i32, i32) {
    %c0_i32 = arith.constant 0 : i32
    %c0_i32_0 = arith.constant 0 : i32
    %c0_i32_1 = arith.constant 0 : i32
    return %arg0, %c0_i32, %c0_i32_0 : i32, i32, i32
  }
  func.func @transform_3(%arg0: i32) -> (i32, i32, i32) {
    %c0_i32 = arith.constant 0 : i32
    %c0_i32_0 = arith.constant 0 : i32
    %c0_i32_1 = arith.constant 0 : i32
    return %arg0, %c0_i32, %c0_i32_0 : i32, i32, i32
  }
}

</mosaic_0001>

<llo_original>
// kernel: tpu_custom_call.1
$region0: #{tpu_custom_call.1}
  #allocation0 [shape = 'u32[]', space=smem, size = 0x4, offset = 0x4, fixed_abs, tag = 'smem constant byte address 0x4 - core index']
  #allocation1 [shape = 'u32[144,128]{1,0:T(1,128)}', space=vmem, size = 0x12000, scoped, tag = 'internal scratch']
  #allocation2 [shape = 'f32[6,128]{1,0:T(8,128)}', space=vmem, size = 0x1000, scoped, tag = 'scratch operand']
  %s0 = inlined_call_operand.vmem [shape: f32[4,6,128], index: 0, kind: input, shape index: {}]
  %s1 = inlined_call_operand.vmem [shape: s32[4,1,128], index: 1, kind: input, shape index: {}]
  %s2 = inlined_call_operand.vmem [shape: f32[4,1,128], index: 2, kind: input, shape index: {}]
  %s3 = inlined_call_operand.hbm [shape: f32[1,1,128], index: 3, kind: output, shape index: {}]
  %s4 = sld [smem:[#allocation0]]
  $region22: #{tpu_custom_call.1} parent=0
    _
  %s6 = ssub.s32 1, %s4
  %s7 = scalar_select 0, %s6, %s4
  $region1: #{tpu_custom_call.1} parent=0
    #allocation3 [shape = 'u8[512]{0}', space=vmem, size = 0x400, scoped, tag = 'output window, operand 0, single buffered']
    #allocation4 [shape = 's32[1]{0}', space=sflag, size = 0x4, scoped, tag = 'scoped memory for tpu_custom_call.1']
    %8 = vsyncpa [#allocation4], 0
    // Predicated region
    $region2: #{tpu_custom_call.1} parent=1 // pred_check
      _
    $region3: #{tpu_custom_call.1} parent=1 // pred_check_branch
      %10 = sbr.rel (0) target = $region5
    $region4: #{tpu_custom_call.1} parent=1 // pred_region
      _
    $region5: #{tpu_custom_call.1} parent=1 // pred_fallthru
      _
    // Predicated region
    $region6: #{tpu_custom_call.1} parent=1 // pred_check
      _
    $region7: #{tpu_custom_call.1} parent=1 // pred_check_branch
      %12 = sbr.rel (0) target = $region9
    $region8: #{tpu_custom_call.1} parent=1 // pred_region
      _
    $region9: #{tpu_custom_call.1} parent=1 // pred_fallthru
      _
    // Predicated region
    $region10: #{tpu_custom_call.1} parent=1 // pred_check
      _
    $region11: #{tpu_custom_call.1} parent=1 // pred_check_branch
      %14 = sbr.rel (0) target = $region13
    $region12: #{tpu_custom_call.1} parent=1 // pred_region
      _
    $region13: #{tpu_custom_call.1} parent=1 // pred_fallthru
      _
    %15 = vst [vmem:[#allocation2] sm:$0x3f] 0.0
    %v16 = vld [vmem:[%s1] sm:$0x1]
    %v17 = vld [vmem:[%s2] sm:$0x1]
    %v18 = vcvt.s32.f32 1
    %v19 = vld [vmem:[%s0] sm:$0x3f]
    %v20 = vmul.f32 %v18, %v19
    %v21 = vadd.f32 %v20, 0.0
    %s22 = scalar_lea.vmem %s1, 1
    %v23 = vld [vmem:[%s22] sm:$0x1]
    %vm24 = vcmp.eq.s32.totalorder %v16, %v23
    %v25 = vsel %vm24, 1, 0
    %v26 = vcvt.s32.f32 %v25
    %s27 = scalar_lea.vmem %s0, 8
    %v28 = vld [vmem:[%s27] sm:$0x3f]
    %v30 = vlaneseq
    %v31 = vshrl.u32 %v30, 7
    %v32 = vsub.s32 0, %v31
    %v33 = vrot.slane %v26, %v32
    %v35 = vmul.f32 %v33, %v28
    %v36 = vadd.f32 %v21, %v35
    %s37 = scalar_lea.vmem %s1, 2
    %v38 = vld [vmem:[%s37] sm:$0x1]
    %vm39 = vcmp.eq.s32.totalorder %v16, %v38
    %v40 = vsel %vm39, 1, 0
    %v41 = vcvt.s32.f32 %v40
    %s42 = scalar_lea.vmem %s0, 16
    %v43 = vld [vmem:[%s42] sm:$0x3f]
    %v45 = vlaneseq
    %v46 = vshrl.u32 %v45, 7
    %v47 = vsub.s32 0, %v46
    %v48 = vrot.slane %v41, %v47
    %v50 = vmul.f32 %v48, %v43
    %v51 = vadd.f32 %v36, %v50
    %s52 = scalar_lea.vmem %s1, 3
    %v53 = vld [vmem:[%s52] sm:$0x1]
    %vm54 = vcmp.eq.s32.totalorder %v16, %v53
    %v55 = vsel %vm54, 1, 0
    %v56 = vcvt.s32.f32 %v55
    %s57 = scalar_lea.vmem %s0, 24
    %v58 = vld [vmem:[%s57] sm:$0x3f]
    %v60 = vlaneseq
    %v61 = vshrl.u32 %v60, 7
    %v62 = vsub.s32 0, %v61
    %v63 = vrot.slane %v56, %v62
    %v65 = vmul.f32 %v63, %v58
    %v66 = vadd.f32 %v51, %v65
    %v68 = vlaneseq
    %v69 = vshrl.u32 %v68, 7
    %v70 = vsub.s32 0, %v69
    %v71 = vrot.slane %v17, %v70
    %v73 = vmul.f32 %v71, %v66
    %v74 = vsub.f32 %v19, %v73
    %v75 = vmul.f32 %v74, %v74
    %v76 = vadd.f32 %v75, 0.0
    %s77 = scalar_lea.vmem %s2, 1
    %v78 = vld [vmem:[%s77] sm:$0x1]
    %vm79 = vcmp.eq.s32.totalorder %v23, %v16
    %v80 = vsel %vm79, 1, 0
    %v81 = vcvt.s32.f32 %v80
    %v83 = vlaneseq
    %v84 = vshrl.u32 %v83, 7
    %v85 = vsub.s32 0, %v84
    %v86 = vrot.slane %v81, %v85
    %v88 = vmul.f32 %v86, %v19
    %v89 = vadd.f32 %v88, 0.0
    %v90 = vmul.f32 %v18, %v28
    %v91 = vadd.f32 %v89, %v90
    %vm92 = vcmp.eq.s32.totalorder %v23, %v38
    %v93 = vsel %vm92, 1, 0
    %v94 = vcvt.s32.f32 %v93
    %v96 = vlaneseq
    %v97 = vshrl.u32 %v96, 7
    %v98 = vsub.s32 0, %v97
    %v99 = vrot.slane %v94, %v98
    %v101 = vmul.f32 %v99, %v43
    %v102 = vadd.f32 %v91, %v101
    %vm103 = vcmp.eq.s32.totalorder %v23, %v53
    %v104 = vsel %vm103, 1, 0
    %v105 = vcvt.s32.f32 %v104
    %v107 = vlaneseq
    %v108 = vshrl.u32 %v107, 7
    %v109 = vsub.s32 0, %v108
    %v110 = vrot.slane %v105, %v109
    %v112 = vmul.f32 %v110, %v58
    %v113 = vadd.f32 %v102, %v112
    %v115 = vlaneseq
    %v116 = vshrl.u32 %v115, 7
    %v117 = vsub.s32 0, %v116
    %v118 = vrot.slane %v78, %v117
    %v120 = vmul.f32 %v118, %v113
    %v121 = vsub.f32 %v28, %v120
    %v122 = vmul.f32 %v121, %v121
    %v123 = vadd.f32 %v76, %v122
    %s124 = scalar_lea.vmem %s2, 2
    %v125 = vld [vmem:[%s124] sm:$0x1]
    %vm126 = vcmp.eq.s32.totalorder %v38, %v16
    %v127 = vsel %vm126, 1, 0
    %v128 = vcvt.s32.f32 %v127
    %v130 = vlaneseq
    %v131 = vshrl.u32 %v130, 7
    %v132 = vsub.s32 0, %v131
    %v133 = vrot.slane %v128, %v132
    %v135 = vmul.f32 %v133, %v19
    %v136 = vadd.f32 %v135, 0.0
    %vm137 = vcmp.eq.s32.totalorder %v38, %v23
    %v138 = vsel %vm137, 1, 0
    %v139 = vcvt.s32.f32 %v138
    %v141 = vlaneseq
    %v142 = vshrl.u32 %v141, 7
    %v143 = vsub.s32 0, %v142
    %v144 = vrot.slane %v139, %v143
    %v146 = vmul.f32 %v144, %v28
    %v147 = vadd.f32 %v136, %v146
    %v148 = vmul.f32 %v18, %v43
    %v149 = vadd.f32 %v147, %v148
    %vm150 = vcmp.eq.s32.totalorder %v38, %v53
    %v151 = vsel %vm150, 1, 0
    %v152 = vcvt.s32.f32 %v151
    %v154 = vlaneseq
    %v155 = vshrl.u32 %v154, 7
    %v156 = vsub.s32 0, %v155
    %v157 = vrot.slane %v152, %v156
    %v159 = vmul.f32 %v157, %v58
    %v160 = vadd.f32 %v149, %v159
    %v162 = vlaneseq
    %v163 = vshrl.u32 %v162, 7
    %v164 = vsub.s32 0, %v163
    %v165 = vrot.slane %v125, %v164
    %v167 = vmul.f32 %v165, %v160
    %v168 = vsub.f32 %v43, %v167
    %v169 = vmul.f32 %v168, %v168
    %v170 = vadd.f32 %v123, %v169
    %s171 = scalar_lea.vmem %s2, 3
    %v172 = vld [vmem:[%s171] sm:$0x1]
    %vm173 = vcmp.eq.s32.totalorder %v53, %v16
    %v174 = vsel %vm173, 1, 0
    %v175 = vcvt.s32.f32 %v174
    %v177 = vlaneseq
    %v178 = vshrl.u32 %v177, 7
    %v179 = vsub.s32 0, %v178
    %v180 = vrot.slane %v175, %v179
    %v182 = vmul.f32 %v180, %v19
    %v183 = vadd.f32 %v182, 0.0
    %vm184 = vcmp.eq.s32.totalorder %v53, %v23
    %v185 = vsel %vm184, 1, 0
    %v186 = vcvt.s32.f32 %v185
    %v188 = vlaneseq
    %v189 = vshrl.u32 %v188, 7
    %v190 = vsub.s32 0, %v189
    %v191 = vrot.slane %v186, %v190
    %v193 = vmul.f32 %v191, %v28
    %v194 = vadd.f32 %v183, %v193
    %vm195 = vcmp.eq.s32.totalorder %v53, %v38
    %v196 = vsel %vm195, 1, 0
    %v197 = vcvt.s32.f32 %v196
    %v199 = vlaneseq
    %v200 = vshrl.u32 %v199, 7
    %v201 = vsub.s32 0, %v200
    %v202 = vrot.slane %v197, %v201
    %v204 = vmul.f32 %v202, %v43
    %v205 = vadd.f32 %v194, %v204
    %v206 = vmul.f32 %v18, %v58
    %v207 = vadd.f32 %v205, %v206
    %v209 = vlaneseq
    %v210 = vshrl.u32 %v209, 7
    %v211 = vsub.s32 0, %v210
    %v212 = vrot.slane %v172, %v211
    %v214 = vmul.f32 %v212, %v207
    %v215 = vsub.f32 %v58, %v214
    %v216 = vmul.f32 %v215, %v215
    %v217 = vadd.f32 %v170, %v216
    %v218 = vld [vmem:[#allocation2] sm:$0x3f]
    %v219 = vadd.f32 %v218, %v217
    %220 = vst [vmem:[#allocation2] sm:$0x3f] %v219
    %v221 = vld [vmem:[#allocation2] sm:$0x3f]
    %vm222 = vcmask 1045504
    %v223 = vsel %vm222, %v221, 0.0
    %v224 = vrot.slane %v223, 4
    %v225 = vadd.f32 %v223, %v224
    %v226 = vrot.slane %v225, 2
    %v227 = vadd.f32 %v225, %v226
    %v228 = vrot.slane %v227, 1
    %v229 = vadd.f32 %v227, %v228
    %230 = vst [vmem:[#allocation3] sm:$0x1] %v229
    // Predicated region
    $region14: #{tpu_custom_call.1} parent=1 // pred_check
      _
    $region15: #{tpu_custom_call.1} parent=1 // pred_check_branch
      %232 = sbr.rel (0) target = $region17
    $region16: #{tpu_custom_call.1} parent=1 // pred_region
      %s234 = ssub.s32 16, 16
      %235 = vsyncadd [#allocation4], %s234
      %s237 = sshll.u32 [#allocation3], 4
      %s238 = int_to_ptr.vmem [resolvable:$true] %s237
      %240 = dma.vmem_to_hbm [thread:$0]  %s238, 16, %s3, [#allocation4]
    $region17: #{tpu_custom_call.1} parent=1 // pred_fallthru
      _
    // Predicated region
    $region18: #{tpu_custom_call.1} parent=1 // pred_check
      _
    $region19: #{tpu_custom_call.1} parent=1 // pred_check_branch
      %242 = sbr.rel (0) target = $region21
    $region20: #{tpu_custom_call.1} parent=1 // pred_region
      %243 = dma.done [#allocation4], 16
    $region21: #{tpu_custom_call.1} parent=1 // pred_fallthru
      _
    %244 = vsyncpa [#allocation4], 1

</llo_original>
